<compile_context>
chip_gen: v7x
topology: tpu7x:2x2x1
jax: 0.10.0
libtpu: 0.0.40
codegen_flags: <defaults>
</compile_context>

<pallas_src>
import functools

import jax
import jax.numpy as jnp
from jax.experimental import pallas as pl
from jax.experimental.pallas import tpu as pltpu

_PAIRWISE_EPS = 1e-6  # matches torch F.pairwise_distance default eps


def _contrastive_tile_kernel(o1_ref, o2_ref, lab_ref, out_ref, *,
                             margin, batch, block_rows, use_mxu_reduce):
    # o1_ref, o2_ref: [TB, D] native-dtype tiles; lab_ref: [TB, 1] f32; out_ref: [8, 128] f32.
    diff = (o1_ref[...].astype(jnp.float32)
            - o2_ref[...].astype(jnp.float32)) + _PAIRWISE_EPS   # torch adds eps to the diff
    sq = diff * diff

    if use_mxu_reduce:
        # Row reduction on the (otherwise idle) MXU: on v7x at 3.2 TB/s with bf16 inputs the VALU
        # slot would otherwise saturate before HBM does.  All 128 result lanes hold the same row
        # sum; lane 0 is taken.  Only used when D % 128 == 0 (fully aligned matmul).
        ones = jnp.ones((sq.shape[-1], 128), dtype=jnp.float32)
        sq_dist = jnp.dot(sq, ones, preferred_element_type=jnp.float32)[:, 0:1]   # [TB, 1]
    else:
        sq_dist = jnp.sum(sq, axis=-1, keepdims=True)                             # [TB, 1]

    dist = jnp.sqrt(sq_dist)                                    # euclidean distance
    lab = lab_ref[...]                                          # [TB, 1] (1=same, 0=diff)
    neg = jnp.maximum(jnp.float32(margin) - dist, 0.0)
    # label * d^2 + (1-label) * clamp(margin - d, 0)^2   (d^2 reused, no sqrt round trip)
    row_loss = lab * sq_dist + (1.0 - lab) * (neg * neg)        # [TB, 1]

    # Mask tail rows so out-of-bounds garbage never pollutes the per-tile partial sum.
    if batch % block_rows != 0:
        row = (pl.program_id(0) * block_rows
               + jax.lax.broadcasted_iota(jnp.int32, (block_rows, 1), 0))
        row_loss = jnp.where(row < batch, row_loss, 0.0)

    tile_sum = jnp.sum(row_loss)
    # Lane-dense, (8,128)-conforming output block: broadcast the partial sum; the wrapper reads
    # element [0, 0] of each block.  4 KiB of unmasked stores per step instead of TB masked ones.
    out_ref[...] = jnp.full((8, 128), tile_sum, dtype=jnp.float32)


def _vmem_limit_bytes() -> int:
    """Explicit scoped-VMEM budget, derived from the chip's physical VMEM with headroom."""
    cap = 64 << 20  # conservative fallback = v7x physical VMEM per TensorCore
    try:
        info = pltpu.get_tpu_info()
        cap = int(getattr(info, "vmem_capacity_bytes", cap))
    except Exception:
        pass
    cap = max(cap, 32 << 20)
    # 3/4 of physical, capped at 64 MiB: v5e/v6e (128 MiB) -> 64 MiB, v7x (64 MiB) -> 48 MiB.
    return min((cap * 3) // 4, 64 << 20)


def _pick_batch_tile(batch: int, embed_dim: int, itemsize: int, vmem_limit: int) -> int:
    """Pick the batch-tile TB: dtype-granule aligned, VMEM-budgeted, grid kept >= 2 when possible."""
    granule = max(8, 32 // itemsize)          # 8 for f32, 16 for bf16/fp16, 32 for 8-bit
    if batch <= granule:
        return batch                           # full-array block (always legal)

    # Conservative per-row VMEM cost: 2 inputs x 2 pipeline buffers in native dtype, a few f32
    # (TB, D) temporaries (casts / diff / sq), plus lane-padded (TB, 1)/(TB, 128) f32 temps+label.
    per_row_bytes = 4 * embed_dim * itemsize + 12 * embed_dim + 4096
    # TODO(synk): for extremely wide embeddings where even a granule-row block exceeds the budget,
    # tile D as an inner "arbitrary" grid axis with a (TB, 1) accumulator; not needed for
    # realistic face-embedding dims (<= a few thousand).
    tb = max(granule, (vmem_limit - (4 << 20)) // per_row_bytes)
    tb = min(tb, batch)
    if batch >= 4 * granule:
        # Keep at least 2 grid steps so both v7x TensorCores get work (batch axis is "parallel").
        tb = min(tb, ((batch // 2) // granule) * granule)
    tb = max(granule, (tb // granule) * granule)
    return tb


def contrastive_loss(output1: jax.Array, output2: jax.Array, label: jax.Array,
                     margin: float = 1.0) -> jax.Array:
    """output1, output2: [B, D] (any float dtype); label: [B] (0/1). Returns scalar f32 loss."""
    B, D = output1.shape
    itemsize = jnp.dtype(output1.dtype).itemsize
    vmem_limit = _vmem_limit_bytes()
    TB = _pick_batch_tile(B, D, itemsize, vmem_limit)
    num_tiles = (B + TB - 1) // TB
    use_mxu = (D % 128 == 0)

    lab = label.astype(jnp.float32).reshape(B, 1)

    partials = pl.pallas_call(
        functools.partial(_contrastive_tile_kernel, margin=float(margin), batch=B,
                          block_rows=TB, use_mxu_reduce=use_mxu),
        out_shape=jax.ShapeDtypeStruct((8 * num_tiles, 128), jnp.float32),
        grid=(num_tiles,),
        in_specs=[
            pl.BlockSpec((TB, D), lambda i: (i, 0)),
            pl.BlockSpec((TB, D), lambda i: (i, 0)),
            pl.BlockSpec((TB, 1), lambda i: (i, 0)),
        ],
        out_specs=pl.BlockSpec((8, 128), lambda i: (i, 0)),
        compiler_params=pltpu.CompilerParams(
            dimension_semantics=("parallel",),
            vmem_limit_bytes=vmem_limit,
        ),
        cost_estimate=pl.CostEstimate(
            flops=4 * B * D + 8 * B,
            transcendentals=B,
            bytes_accessed=2 * B * D * itemsize + 4 * B + num_tiles * 8 * 128 * 4,
        ),
    )(output1, output2, lab)

    # Each (8, 128) block is the tile's partial sum broadcast; element [0, 0] per block suffices.
    tile_sums = partials.reshape(num_tiles, 8 * 128)[:, 0]
    return jnp.sum(tile_sums) / B


def _reference_loss(output1, output2, label, margin=1.0):
    # Pure-JAX reference mirroring the PyTorch module for a sanity check.
    o1 = output1.astype(jnp.float32)
    o2 = output2.astype(jnp.float32)
    d = jnp.sqrt(jnp.sum((o1 - o2 + _PAIRWISE_EPS) ** 2, axis=-1))
    lab = label.astype(jnp.float32)
    return jnp.mean(lab * d * d + (1.0 - lab) * jnp.maximum(margin - d, 0.0) ** 2)


if __name__ == "__main__":
    key = jax.random.PRNGKey(0)
    k1, k2, k3 = jax.random.split(key, 3)

    # Small f32 case (single tile, VPU/XLU reduce path since D % 128 != 0).
    batch, embed_dim = 8, 32
    output1 = jax.random.normal(k1, (batch, embed_dim), dtype=jnp.float32)
    output2 = jax.random.normal(k2, (batch, embed_dim), dtype=jnp.float32)
    label = jax.random.bernoulli(k3, 0.5, (batch,)).astype(jnp.int32)

    loss = contrastive_loss(output1, output2, label)
    jax.block_until_ready(loss)
    ref = _reference_loss(output1, output2, label)
    assert jnp.allclose(loss, ref, rtol=1e-5, atol=1e-5), (loss, ref)

    # bf16 case with D % 128 == 0 (MXU reduce path), multiple tiles and B % TB != 0 (tail masking).
    k4, k5, k6 = jax.random.split(jax.random.PRNGKey(1), 3)
    B2, D2 = 300, 256
    p1 = jax.random.normal(k4, (B2, D2), dtype=jnp.float32).astype(jnp.bfloat16)
    p2 = jax.random.normal(k5, (B2, D2), dtype=jnp.float32).astype(jnp.bfloat16)
    lab2 = jax.random.bernoulli(k6, 0.5, (B2,)).astype(jnp.int32)

    loss2 = contrastive_loss(p1, p2, lab2, margin=1.0)
    jax.block_until_ready(loss2)
    ref2 = _reference_loss(p1, p2, lab2, margin=1.0)
    assert jnp.allclose(loss2, ref2, rtol=1e-2, atol=1e-2), (loss2, ref2)

    print("KERNEL_OK")
</pallas_src>

<mosaic_0001>
module attributes {stable_mosaic.version = 11 : i64} {
  func.func @_contrastive_tile_kernel(%arg0: i32, %arg1: memref<8x32xf32, #tpu.memory_space<vmem>>, %arg2: memref<8x32xf32, #tpu.memory_space<vmem>>, %arg3: memref<8x1xf32, #tpu.memory_space<vmem>>, %arg4: memref<8x128xf32, #tpu.memory_space<vmem>>) attributes {dimension_semantics = [#tpu.dimension_semantics<parallel>], iteration_bounds = array<i64: 1>, scalar_prefetch = 0 : i64, scratch_operands = 0 : i64, tpu.core_type = #tpu.core_type<tc>, window_params = [{transform_indices = @transform_0, window_bounds = array<i64: 8, 32>}, {transform_indices = @transform_1, window_bounds = array<i64: 8, 32>}, {transform_indices = @transform_2, window_bounds = array<i64: 8, 1>}, {transform_indices = @transform_3, window_bounds = array<i64: 8, 128>}]} {
    %c0 = arith.constant 0 : index
    %c0_0 = arith.constant 0 : index
    %0 = vector.load %arg1[%c0, %c0_0] : memref<8x32xf32, #tpu.memory_space<vmem>>, vector<8x32xf32>
    %c0_1 = arith.constant 0 : index
    %c0_2 = arith.constant 0 : index
    %1 = vector.load %arg2[%c0_1, %c0_2] : memref<8x32xf32, #tpu.memory_space<vmem>>, vector<8x32xf32>
    %2 = arith.subf %0, %1 : vector<8x32xf32>
    %cst = arith.constant 9.99999997E-7 : f32
    %3 = vector.broadcast %cst : f32 to vector<8x32xf32>
    %4 = arith.addf %2, %3 : vector<8x32xf32>
    %5 = arith.mulf %4, %4 : vector<8x32xf32>
    %cst_3 = arith.constant dense<0.000000e+00> : vector<8xf32>
    %6 = vector.multi_reduction <add>, %5, %cst_3 [1] : vector<8x32xf32> to vector<8xf32>
    %7 = vector.shape_cast %6 : vector<8xf32> to vector<8x1xf32>
    %8 = math.sqrt %7 : vector<8x1xf32>
    %c0_4 = arith.constant 0 : index
    %c0_5 = arith.constant 0 : index
    %9 = vector.load %arg3[%c0_4, %c0_5] : memref<8x1xf32, #tpu.memory_space<vmem>>, vector<8x1xf32>
    %cst_6 = arith.constant 1.000000e+00 : f32
    %10 = vector.broadcast %cst_6 : f32 to vector<8x1xf32>
    %11 = arith.subf %10, %8 : vector<8x1xf32>
    %cst_7 = arith.constant 0.000000e+00 : f32
    %12 = vector.broadcast %cst_7 : f32 to vector<8x1xf32>
    %13 = arith.maximumf %11, %12 : vector<8x1xf32>
    %14 = arith.mulf %9, %7 : vector<8x1xf32>
    %cst_8 = arith.constant 1.000000e+00 : f32
    %15 = vector.broadcast %cst_8 : f32 to vector<8x1xf32>
    %16 = arith.subf %15, %9 : vector<8x1xf32>
    %17 = arith.mulf %13, %13 : vector<8x1xf32>
    %18 = arith.mulf %16, %17 : vector<8x1xf32>
    %19 = arith.addf %14, %18 : vector<8x1xf32>
    %20 = vector.shape_cast %19 : vector<8x1xf32> to vector<1x8x1xf32>
    %cst_9 = arith.constant dense<0.000000e+00> : vector<1xf32>
    %21 = vector.multi_reduction <add>, %20, %cst_9 [1, 2] : vector<1x8x1xf32> to vector<1xf32>
    %22 = vector.shape_cast %21 : vector<1xf32> to vector<1x1x1xf32>
    %23 = vector.extract %22[0, 0, 0] : f32 from vector<1x1x1xf32>
    %24 = vector.broadcast %23 : f32 to vector<8x128xf32>
    %c0_10 = arith.constant 0 : index
    %c0_11 = arith.constant 0 : index
    %25 = vector.load %arg4[%c0_10, %c0_11] : memref<8x128xf32, #tpu.memory_space<vmem>>, vector<8x128xf32>
    tpu.vector_store %arg4[%c0_10, %c0_11], %24 {strides = array<i32>} : memref<8x128xf32, #tpu.memory_space<vmem>>, vector<8x128xf32>,
    return
  }
  func.func @transform_0(%arg0: i32) -> (i32, i32) {
    %c0_i32 = arith.constant 0 : i32
    %c0_i32_0 = arith.constant 0 : i32
    return %arg0, %c0_i32 : i32, i32
  }
  func.func @transform_1(%arg0: i32) -> (i32, i32) {
    %c0_i32 = arith.constant 0 : i32
    %c0_i32_0 = arith.constant 0 : i32
    return %arg0, %c0_i32 : i32, i32
  }
  func.func @transform_2(%arg0: i32) -> (i32, i32) {
    %c0_i32 = arith.constant 0 : i32
    %c0_i32_0 = arith.constant 0 : i32
    return %arg0, %c0_i32 : i32, i32
  }
  func.func @transform_3(%arg0: i32) -> (i32, i32) {
    %c0_i32 = arith.constant 0 : i32
    %c0_i32_0 = arith.constant 0 : i32
    return %arg0, %c0_i32 : i32, i32
  }
}

</mosaic_0001>

<llo_original>
// kernel: tpu_custom_call.1
$region0: #{tpu_custom_call.1}
  #allocation0 [shape = 'u32[]', space=smem, size = 0x4, offset = 0x4, fixed_abs, tag = 'smem constant byte address 0x4 - core index']
  #allocation1 [shape = 'u32[144,128]{1,0:T(1,128)}', space=vmem, size = 0x12000, scoped, tag = 'internal scratch']
  %s0 = inlined_call_operand.vmem [shape: f32[8,32], index: 0, kind: input, shape index: {}]
  %s1 = inlined_call_operand.hbm [shape: f32[8,32], index: 1, kind: input, shape index: {}]
  %s2 = inlined_call_operand.vmem [shape: f32[8,1], index: 2, kind: input, shape index: {}]
  %s3 = inlined_call_operand.hbm [shape: f32[8,128], index: 3, kind: output, shape index: {}]
  %s4 = sld [smem:[#allocation0]]
  $region26: #{tpu_custom_call.1} parent=0
    _
  %s6 = ssub.s32 1, %s4
  %s7 = scalar_select 0, %s6, %s4
  $region1: #{tpu_custom_call.1} parent=0
    #allocation2 [shape = 'u8[4096]{0}', space=vmem, size = 0x1000, scoped, tag = 'input window, operand 1, single buffered']
    #allocation3 [shape = 's32[1]{0}', space=sflag, size = 0x4, scoped, tag = 'scoped memory for tpu_custom_call.1']
    #allocation4 [shape = 's32[1]{0}', space=sflag, size = 0x4, scoped, tag = 'scoped memory for tpu_custom_call.1']
    #allocation5 [shape = 'u8[4096]{0}', space=vmem, size = 0x1000, scoped, tag = 'output window, operand 0, single buffered']
    %8 = vsyncpa [#allocation3], 0
    %9 = vsyncpa [#allocation4], 0
    // Predicated region
    $region2: #{tpu_custom_call.1} parent=1 // pred_check
      _
    $region3: #{tpu_custom_call.1} parent=1 // pred_check_branch
      %11 = sbr.rel (0) target = $region5
    $region4: #{tpu_custom_call.1} parent=1 // pred_region
      _
    $region5: #{tpu_custom_call.1} parent=1 // pred_fallthru
      _
    // Predicated region
    $region6: #{tpu_custom_call.1} parent=1 // pred_check
      _
    $region7: #{tpu_custom_call.1} parent=1 // pred_check_branch
      %13 = sbr.rel (0) target = $region9
    $region8: #{tpu_custom_call.1} parent=1 // pred_region
      %s15 = ssub.s32 128, 128
      %16 = vsyncadd [#allocation3], %s15
      %s18 = sshll.u32 [#allocation2], 4
      %s19 = int_to_ptr.vmem [resolvable:$true] %s18
      %21 = dma.hbm_to_vmem [thread:$0]  %s1, 128, %s19, [#allocation3]
    $region9: #{tpu_custom_call.1} parent=1 // pred_fallthru
      _
    // Predicated region
    $region10: #{tpu_custom_call.1} parent=1 // pred_check
      _
    $region11: #{tpu_custom_call.1} parent=1 // pred_check_branch
      %23 = sbr.rel (0) target = $region13
    $region12: #{tpu_custom_call.1} parent=1 // pred_region
      _
    $region13: #{tpu_custom_call.1} parent=1 // pred_fallthru
      _
    // Predicated region
    $region14: #{tpu_custom_call.1} parent=1 // pred_check
      _
    $region15: #{tpu_custom_call.1} parent=1 // pred_check_branch
      %25 = sbr.rel (0) target = $region17
    $region16: #{tpu_custom_call.1} parent=1 // pred_region
      %26 = dma.done [#allocation3], 128
    $region17: #{tpu_custom_call.1} parent=1 // pred_fallthru
      _
    %v27 = vld [vmem:[%s0] sm:$0xff]
    %v28 = vld [vmem:[#allocation2] sm:$0xff]
    %v29 = vsub.f32 %v27, %v28
    %v30 = vadd.f32 %v29, 1e-06
    %v31 = vmul.f32 %v30, %v30
    %vm32 = vcmask 261120
    %v33 = vsel %vm32, %v31, 0.0
    %34 = vadd.xlane.f32.xlu0 %v33
    %v35 = vpop.xlane.xlu0 %34
    %v36 = vrsqrt.pop %v35
    %v37 = vmul.f32 %v35, %v36
    %vm38 = vcmp.eq.f32.partialorder %v35, inf
    %v39 = vsel %vm38, %v35, %v37
    %vm40 = vcmp.eq.f32.partialorder %v35, 0.0
    %v41 = vand.u32 %v35, 2147483648
    %v42 = vsel %vm40, %v41, %v39
    %v43 = vld [vmem:[%s2] sm:$0xff]
    %v44 = vsub.f32 1.0, %v42
    %v45 = vmax.f32 %v44, 0.0
    %v46 = vmul.f32 %v43, %v35
    %v47 = vsub.f32 1.0, %v43
    %v48 = vmul.f32 %v45, %v45
    %v49 = vmul.f32 %v47, %v48
    %v50 = vadd.f32 %v46, %v49
    %vm51 = vcmask 7168
    %v52 = vsel %vm51, %v50, 0.0
    %53 = vadd.xlane.f32.xlu0 %v52
    %v54 = vpop.xlane.xlu0 %53
    %v55 = vrot.slane %v54, 4
    %v56 = vadd.f32 %v54, %v55
    %v57 = vrot.slane %v56, 2
    %v58 = vadd.f32 %v56, %v57
    %v59 = vrot.slane %v58, 1
    %v60 = vadd.f32 %v58, %v59
    %s61 = vtos %v60
    %v62 = vstv %s61
    %63 = vst [vmem:[#allocation5] sm:$0xff] %v62
    // Predicated region
    $region18: #{tpu_custom_call.1} parent=1 // pred_check
      _
    $region19: #{tpu_custom_call.1} parent=1 // pred_check_branch
      %65 = sbr.rel (0) target = $region21
    $region20: #{tpu_custom_call.1} parent=1 // pred_region
      %s67 = ssub.s32 128, 128
      %68 = vsyncadd [#allocation4], %s67
      %s70 = sshll.u32 [#allocation5], 4
      %s71 = int_to_ptr.vmem [resolvable:$true] %s70
      %73 = dma.vmem_to_hbm [thread:$0]  %s71, 128, %s3, [#allocation4]
    $region21: #{tpu_custom_call.1} parent=1 // pred_fallthru
      _
    // Predicated region
    $region22: #{tpu_custom_call.1} parent=1 // pred_check
      _
    $region23: #{tpu_custom_call.1} parent=1 // pred_check_branch
      %75 = sbr.rel (0) target = $region25
    $region24: #{tpu_custom_call.1} parent=1 // pred_region
      %76 = dma.done [#allocation4], 128
    $region25: #{tpu_custom_call.1} parent=1 // pred_fallthru
      _
    %77 = vsyncpa [#allocation3], 1
    %78 = vsyncpa [#allocation4], 1

</llo_original>
